<compile_context>
chip_gen: v7x
topology: tpu7x:2x2x1
jax: 0.10.0
libtpu: 0.0.40
codegen_flags: <defaults>
</compile_context>

<pallas_src>
import jax
import jax.numpy as jnp
from jax.experimental import pallas as pl
from jax.experimental.pallas import tpu as pltpu


def tinynet_kernel(x_ref, w1_ref, b1_ref, w2_ref, b2_ref, w3_ref, b3_ref, o_ref):
    x = x_ref[...]                                             # (TILE_B, 1)

    # Layer 1: (B,1) @ (1,64) is a rank-1 update -> pure VPU broadcast mul.
    h1 = jnp.tanh(x * w1_ref[...] + b1_ref[...])               # (TILE_B, 64)

    # Layer 2: the only real matmul -> MXU with f32 accumulation.
    # TODO(synk): cast h1/w2 to bf16 here if a large-batch MXU-bound use case
    # appears and a ~1e-3 tolerance is acceptable.
    h2 = jnp.tanh(
        jnp.dot(h1, w2_ref[...], preferred_element_type=jnp.float32)
        + b2_ref[...]
    )                                                          # (TILE_B, 64)

    # Layer 3: (B,64) @ (64,1) -> VPU multiply + XLU lane reduce, plus the
    # b3 scalar read from SMEM. Avoids popping a lane-sparse MXU result.
    y = jnp.sum(h2 * w3_ref[...], axis=-1, keepdims=True) + b3_ref[0, 0]
    o_ref[...] = y.astype(o_ref.dtype)


def _round_up(n, m):
    return ((n + m - 1) // m) * m


def tinynet_forward(x, params, tile_b=512):
    """x: (B, 1) float32. params: dict of w1,b1,w2,b2,w3,b3."""
    B = x.shape[0]
    w1, b1, w2, b2, w3, b3 = (
        params["w1"], params["b1"], params["w2"],
        params["b2"], params["w3"], params["b3"],
    )

    # Keep the tile sublane-aligned (multiple of 8) and never bigger than
    # the (rounded-up) batch; 512 rows of f32 intermediates stay well inside
    # every chip's VMEM budget (incl. v7x's 64 MiB) and mostly vreg-resident.
    tile_b = min(tile_b, _round_up(B, 8))
    grid = (pl.cdiv(B, tile_b),)

    return pl.pallas_call(
        tinynet_kernel,
        out_shape=jax.ShapeDtypeStruct((B, 1), jnp.float32),
        grid=grid,
        in_specs=[
            # Batched input: tiled along batch, streamed/double-buffered.
            pl.BlockSpec((tile_b, 1), lambda i: (i, 0)),
            # Weights & biases: constant index_map -> DMA'd once, stay resident.
            pl.BlockSpec((1, 64), lambda i: (0, 0)),     # w1  (1, 64)
            pl.BlockSpec((1, 64), lambda i: (0, 0)),     # b1  (1, 64)
            pl.BlockSpec((64, 64), lambda i: (0, 0)),    # w2  (64, 64)
            pl.BlockSpec((1, 64), lambda i: (0, 0)),     # b2  (1, 64)
            pl.BlockSpec((1, 64), lambda i: (0, 0)),     # w3  (1, 64) row
            # b3 is a single scalar -> SMEM, read as b3_ref[0, 0].
            pl.BlockSpec(memory_space=pltpu.MemorySpace.SMEM),
        ],
        out_specs=pl.BlockSpec((tile_b, 1), lambda i: (i, 0)),
        compiler_params=pltpu.CompilerParams(
            dimension_semantics=("parallel",),   # shards batch across v7x's 2 TCs
        ),
    )(x, w1, b1, w2, b2, w3, b3)


def init_params(key):
    """Deterministic init mimicking nn.Linear's U(-1/sqrt(fan_in), 1/sqrt(fan_in))."""
    ks = jax.random.split(key, 6)

    def uniform(k, shape, fan_in):
        bound = 1.0 / jnp.sqrt(jnp.float32(fan_in))
        return jax.random.uniform(
            k, shape, dtype=jnp.float32, minval=-bound, maxval=bound
        )

    return {
        "w1": uniform(ks[0], (1, 64), 1),     # Linear(1, 64).weight.T
        "b1": uniform(ks[1], (1, 64), 1),     # Linear(1, 64).bias
        "w2": uniform(ks[2], (64, 64), 64),   # Linear(64, 64).weight.T
        "b2": uniform(ks[3], (1, 64), 64),    # Linear(64, 64).bias
        "w3": uniform(ks[4], (1, 64), 64),    # Linear(64, 1).weight (row form)
        "b3": uniform(ks[5], (1, 1), 64),     # Linear(64, 1).bias
    }


def reference_forward(x, p):
    h1 = jnp.tanh(x @ p["w1"] + p["b1"])
    h2 = jnp.tanh(h1 @ p["w2"] + p["b2"])
    return h2 @ p["w3"].T + p["b3"]


if __name__ == "__main__":
    key = jax.random.PRNGKey(0)
    k_x, k_p = jax.random.split(key)

    # Note: at batch sizes this small the pallas_call launch dominates; the
    # kernel only pays off when many rows are batched per call.
    batch = 8
    x = jax.random.normal(k_x, (batch, 1), dtype=jnp.float32)
    params = init_params(k_p)

    out = tinynet_forward(x, params)
    out = jax.block_until_ready(out)

    ref = reference_forward(x, params)
    assert out.shape == (batch, 1)
    assert jnp.allclose(out, ref, atol=1e-5, rtol=1e-5)

    # Also exercise a multi-tile grid (partial last block) to validate tiling.
    big_b = 1100
    xb = jax.random.normal(k_x, (big_b, 1), dtype=jnp.float32)
    outb = jax.block_until_ready(tinynet_forward(xb, params))
    assert outb.shape == (big_b, 1)
    assert jnp.allclose(outb, reference_forward(xb, params), atol=1e-5, rtol=1e-5)

    print("KERNEL_OK")
</pallas_src>

<mosaic_0001>
module attributes {stable_mosaic.version = 11 : i64} {
  func.func @tinynet_kernel(%arg0: i32, %arg1: memref<8x1xf32, #tpu.memory_space<vmem>>, %arg2: memref<1x64xf32, #tpu.memory_space<vmem>>, %arg3: memref<1x64xf32, #tpu.memory_space<vmem>>, %arg4: memref<64x64xf32, #tpu.memory_space<vmem>>, %arg5: memref<1x64xf32, #tpu.memory_space<vmem>>, %arg6: memref<1x64xf32, #tpu.memory_space<vmem>>, %arg7: memref<1x1xf32, #tpu.memory_space<smem>>, %arg8: memref<8x1xf32, #tpu.memory_space<vmem>>) attributes {dimension_semantics = [#tpu.dimension_semantics<parallel>], iteration_bounds = array<i64: 1>, scalar_prefetch = 0 : i64, scratch_operands = 0 : i64, tpu.core_type = #tpu.core_type<tc>, window_params = [{transform_indices = @transform_0, window_bounds = array<i64: 8, 1>}, {pipeline_mode = #tpu.pipeline_mode<synchronous>, transform_indices = @transform_1, window_bounds = array<i64: 1, 64>}, {pipeline_mode = #tpu.pipeline_mode<synchronous>, transform_indices = @transform_2, window_bounds = array<i64: 1, 64>}, {pipeline_mode = #tpu.pipeline_mode<synchronous>, transform_indices = @transform_3, window_bounds = array<i64: 64, 64>}, {pipeline_mode = #tpu.pipeline_mode<synchronous>, transform_indices = @transform_4, window_bounds = array<i64: 1, 64>}, {pipeline_mode = #tpu.pipeline_mode<synchronous>, transform_indices = @transform_5, window_bounds = array<i64: 1, 64>}, {transform_indices = @transform_6, window_bounds = array<i64: 1, 1>}, {transform_indices = @transform_7, window_bounds = array<i64: 8, 1>}]} {
    %c0 = arith.constant 0 : index
    %c0_0 = arith.constant 0 : index
    %0 = vector.load %arg1[%c0, %c0_0] : memref<8x1xf32, #tpu.memory_space<vmem>>, vector<8x1xf32>
    %c0_1 = arith.constant 0 : index
    %c0_2 = arith.constant 0 : index
    %1 = vector.load %arg2[%c0_1, %c0_2] : memref<1x64xf32, #tpu.memory_space<vmem>>, vector<1x64xf32>
    %2 = vector.broadcast %0 : vector<8x1xf32> to vector<8x64xf32>
    %3 = vector.broadcast %1 : vector<1x64xf32> to vector<8x64xf32>
    %4 = arith.mulf %2, %3 : vector<8x64xf32>
    %c0_3 = arith.constant 0 : index
    %c0_4 = arith.constant 0 : index
    %5 = vector.load %arg3[%c0_3, %c0_4] : memref<1x64xf32, #tpu.memory_space<vmem>>, vector<1x64xf32>
    %6 = vector.broadcast %5 : vector<1x64xf32> to vector<8x64xf32>
    %7 = arith.addf %4, %6 : vector<8x64xf32>
    %8 = math.tanh %7 : vector<8x64xf32>
    %c0_5 = arith.constant 0 : index
    %c0_6 = arith.constant 0 : index
    %9 = vector.load %arg4[%c0_5, %c0_6] : memref<64x64xf32, #tpu.memory_space<vmem>>, vector<64x64xf32>
    %cst = arith.constant dense<0.000000e+00> : vector<8x64xf32>
    %10 = tpu.matmul %8, %9, %cst {dimension_numbers = #tpu.dot_dimension_numbers<[1], [0], [0], [1], [0, 0, 1, 1], [], []>} : vector<8x64xf32>, vector<64x64xf32>, vector<8x64xf32> -> vector<8x64xf32>
    %c0_7 = arith.constant 0 : index
    %c0_8 = arith.constant 0 : index
    %11 = vector.load %arg5[%c0_7, %c0_8] : memref<1x64xf32, #tpu.memory_space<vmem>>, vector<1x64xf32>
    %12 = vector.broadcast %11 : vector<1x64xf32> to vector<8x64xf32>
    %13 = arith.addf %10, %12 : vector<8x64xf32>
    %14 = math.tanh %13 : vector<8x64xf32>
    %c0_9 = arith.constant 0 : index
    %c0_10 = arith.constant 0 : index
    %15 = vector.load %arg6[%c0_9, %c0_10] : memref<1x64xf32, #tpu.memory_space<vmem>>, vector<1x64xf32>
    %16 = vector.broadcast %15 : vector<1x64xf32> to vector<8x64xf32>
    %17 = arith.mulf %14, %16 : vector<8x64xf32>
    %cst_11 = arith.constant dense<0.000000e+00> : vector<8xf32>
    %18 = vector.multi_reduction <add>, %17, %cst_11 [1] : vector<8x64xf32> to vector<8xf32>
    %19 = vector.shape_cast %18 : vector<8xf32> to vector<8x1xf32>
    %c0_12 = arith.constant 0 : index
    %c0_13 = arith.constant 0 : index
    %20 = memref.load %arg7[%c0_12, %c0_13] : memref<1x1xf32, #tpu.memory_space<smem>>
    %21 = vector.broadcast %20 : f32 to vector<8x1xf32>
    %22 = arith.addf %19, %21 : vector<8x1xf32>
    %c0_14 = arith.constant 0 : index
    %c0_15 = arith.constant 0 : index
    %23 = vector.load %arg8[%c0_14, %c0_15] : memref<8x1xf32, #tpu.memory_space<vmem>>, vector<8x1xf32>
    tpu.vector_store %arg8[%c0_14, %c0_15], %22 {strides = array<i32>} : memref<8x1xf32, #tpu.memory_space<vmem>>, vector<8x1xf32>,
    return
  }
  func.func @transform_0(%arg0: i32) -> (i32, i32) {
    %c0_i32 = arith.constant 0 : i32
    %c0_i32_0 = arith.constant 0 : i32
    return %arg0, %c0_i32 : i32, i32
  }
  func.func @transform_1(%arg0: i32) -> (i32, i32) {
    %c0_i32 = arith.constant 0 : i32
    %c0_i32_0 = arith.constant 0 : i32
    %c0_i32_1 = arith.constant 0 : i32
    return %c0_i32, %c0_i32_0 : i32, i32
  }
  func.func @transform_2(%arg0: i32) -> (i32, i32) {
    %c0_i32 = arith.constant 0 : i32
    %c0_i32_0 = arith.constant 0 : i32
    %c0_i32_1 = arith.constant 0 : i32
    return %c0_i32, %c0_i32_0 : i32, i32
  }
  func.func @transform_3(%arg0: i32) -> (i32, i32) {
    %c0_i32 = arith.constant 0 : i32
    %c0_i32_0 = arith.constant 0 : i32
    %c0_i32_1 = arith.constant 0 : i32
    return %c0_i32, %c0_i32_0 : i32, i32
  }
  func.func @transform_4(%arg0: i32) -> (i32, i32) {
    %c0_i32 = arith.constant 0 : i32
    %c0_i32_0 = arith.constant 0 : i32
    %c0_i32_1 = arith.constant 0 : i32
    return %c0_i32, %c0_i32_0 : i32, i32
  }
  func.func @transform_5(%arg0: i32) -> (i32, i32) {
    %c0_i32 = arith.constant 0 : i32
    %c0_i32_0 = arith.constant 0 : i32
    %c0_i32_1 = arith.constant 0 : i32
    return %c0_i32, %c0_i32_0 : i32, i32
  }
  func.func @transform_6(%arg0: i32) -> (i32, i32) {
    %c0_i32 = arith.constant 0 : i32
    %c0_i32_0 = arith.constant 0 : i32
    %c0_i32_1 = arith.constant 0 : i32
    return %c0_i32, %c0_i32_0 : i32, i32
  }
  func.func @transform_7(%arg0: i32) -> (i32, i32) {
    %c0_i32 = arith.constant 0 : i32
    %c0_i32_0 = arith.constant 0 : i32
    return %arg0, %c0_i32 : i32, i32
  }
}

</mosaic_0001>

<llo_original>
// kernel: tpu_custom_call.1
$region0: #{tpu_custom_call.1}
  #allocation0 [shape = 'u32[]', space=smem, size = 0x4, offset = 0x4, fixed_abs, tag = 'smem constant byte address 0x4 - core index']
  #allocation1 [shape = 'u32[144,128]{1,0:T(1,128)}', space=vmem, size = 0x12000, scoped, tag = 'internal scratch']
  #allocation2 [shape = 'f32[1,1]{1,0:T(1,128)S(6)}', space=smem, size = 0x200, scoped, tag = 'scoped memory for tpu_custom_call.1']
  %s0 = inlined_call_operand.vmem [shape: f32[8,1], index: 0, kind: input, shape index: {}]
  %s1 = inlined_call_operand.vmem [shape: f32[1,64], index: 1, kind: input, shape index: {}]
  %s2 = inlined_call_operand.vmem [shape: f32[1,64], index: 2, kind: input, shape index: {}]
  %s3 = inlined_call_operand.hbm [shape: f32[64,64], index: 3, kind: input, shape index: {}]
  %s4 = inlined_call_operand.vmem [shape: f32[1,64], index: 4, kind: input, shape index: {}]
  %s5 = inlined_call_operand.vmem [shape: f32[1,64], index: 5, kind: input, shape index: {}]
  %s6 = inlined_call_operand.<no memory space> [shape: f32[1,1], index: 6, kind: input, shape index: {}]
  %s7 = inlined_call_operand.vmem [shape: f32[8,1], index: 7, kind: output, shape index: {}]
  %s8 = sld [smem:[#allocation0]]
  $region42: #{tpu_custom_call.1} parent=0
    _
  %s10 = ssub.s32 1, %s8
  %s11 = scalar_select 0, %s10, %s8
  %12 = sst [smem:[#allocation2]] %s6
  $region1: #{tpu_custom_call.1} parent=0
    #allocation3 [shape = 'u8[32768]{0}', space=vmem, size = 0x8000, scoped, tag = 'input window, operand 3, single buffered']
    #allocation4 [shape = 's32[1]{0}', space=sflag, size = 0x4, scoped, tag = 'scoped memory for tpu_custom_call.1']
    %13 = vsyncpa [#allocation4], 0
    // Predicated region
    $region2: #{tpu_custom_call.1} parent=1 // pred_check
      _
    $region3: #{tpu_custom_call.1} parent=1 // pred_check_branch
      %15 = sbr.rel (0) target = $region5
    $region4: #{tpu_custom_call.1} parent=1 // pred_region
      _
    $region5: #{tpu_custom_call.1} parent=1 // pred_fallthru
      _
    // Predicated region
    $region6: #{tpu_custom_call.1} parent=1 // pred_check
      _
    $region7: #{tpu_custom_call.1} parent=1 // pred_check_branch
      %17 = sbr.rel (0) target = $region9
    $region8: #{tpu_custom_call.1} parent=1 // pred_region
      _
    $region9: #{tpu_custom_call.1} parent=1 // pred_fallthru
      _
    // Predicated region
    $region10: #{tpu_custom_call.1} parent=1 // pred_check
      _
    $region11: #{tpu_custom_call.1} parent=1 // pred_check_branch
      %19 = sbr.rel (0) target = $region13
    $region12: #{tpu_custom_call.1} parent=1 // pred_region
      _
    $region13: #{tpu_custom_call.1} parent=1 // pred_fallthru
      _
    // Predicated region
    $region14: #{tpu_custom_call.1} parent=1 // pred_check
      _
    $region15: #{tpu_custom_call.1} parent=1 // pred_check_branch
      %21 = sbr.rel (0) target = $region17
    $region16: #{tpu_custom_call.1} parent=1 // pred_region
      %s23 = ssub.s32 1024, 1024
      %24 = vsyncadd [#allocation4], %s23
      %s25 = sshll.u32 [#allocation3], 4
      %s26 = int_to_ptr.vmem [resolvable:$true] %s25
      %31 = dma.hbm_to_vmem [thread:$0]  %s3, 1024, %s26, [#allocation4], 128, 128, 8
    $region17: #{tpu_custom_call.1} parent=1 // pred_fallthru
      _
    // Predicated region
    $region18: #{tpu_custom_call.1} parent=1 // pred_check
      _
    $region19: #{tpu_custom_call.1} parent=1 // pred_check_branch
      %33 = sbr.rel (0) target = $region21
    $region20: #{tpu_custom_call.1} parent=1 // pred_region
      _
    $region21: #{tpu_custom_call.1} parent=1 // pred_fallthru
      _
    // Predicated region
    $region22: #{tpu_custom_call.1} parent=1 // pred_check
      _
    $region23: #{tpu_custom_call.1} parent=1 // pred_check_branch
      %35 = sbr.rel (0) target = $region25
    $region24: #{tpu_custom_call.1} parent=1 // pred_region
      _
    $region25: #{tpu_custom_call.1} parent=1 // pred_fallthru
      _
    // Predicated region
    $region26: #{tpu_custom_call.1} parent=1 // pred_check
      _
    $region27: #{tpu_custom_call.1} parent=1 // pred_check_branch
      %37 = sbr.rel (0) target = $region29
    $region28: #{tpu_custom_call.1} parent=1 // pred_region
      _
    $region29: #{tpu_custom_call.1} parent=1 // pred_fallthru
      _
    // Predicated region
    $region30: #{tpu_custom_call.1} parent=1 // pred_check
      _
    $region31: #{tpu_custom_call.1} parent=1 // pred_check_branch
      %39 = sbr.rel (0) target = $region33
    $region32: #{tpu_custom_call.1} parent=1 // pred_region
      %40 = dma.done [#allocation4], 1024
    $region33: #{tpu_custom_call.1} parent=1 // pred_fallthru
      _
    %v41 = vld [vmem:[%s0] sm:$0xff]
    %v42 = vld [vmem:[%s1] sm:$0x1]
    %44 = vset.pattern.permute.xlu0 0
    %45 = vperm.xlu0 %44, %v41
    %v46 = vpop.permute.xlu0 %45
    %v49 = vlaneseq
    %v50 = vshrl.u32 %v49, 7
    %v51 = vsub.s32 0, %v50
    %v52 = vrot.slane %v42, %v51
    %v54 = vmul.f32 %v46, %v52
    %v55 = vld [vmem:[%s2] sm:$0x1]
    %v57 = vlaneseq
    %v58 = vshrl.u32 %v57, 7
    %v59 = vsub.s32 0, %v58
    %v60 = vrot.slane %v55, %v59
    %v62 = vadd.f32 %v54, %v60
    %v63 = vtanh.pop %v62
    %v64 = vld [vmem:[#allocation3] sm:$0xff]
    %v65 = vld [vmem:[#allocation3 + $0x8] sm:$0xff]
    %v66 = vld [vmem:[#allocation3 + $0x10] sm:$0xff]
    %v67 = vld [vmem:[#allocation3 + $0x18] sm:$0xff]
    %v68 = vld [vmem:[#allocation3 + $0x20] sm:$0xff]
    %v69 = vld [vmem:[#allocation3 + $0x28] sm:$0xff]
    %v70 = vld [vmem:[#allocation3 + $0x30] sm:$0xff]
    %v71 = vld [vmem:[#allocation3 + $0x38] sm:$0xff]
    %v72 = vld [vmem:[%s4] sm:$0x1]
    %v74 = vlaneseq
    %v75 = vshrl.u32 %v74, 7
    %v76 = vsub.s32 0, %v75
    %v77 = vrot.slane %v72, %v76
    %vm79 = vcmask 523264
    %v81 = vsel %vm79, %v63, 0
    %83 = vmatprep.subr.mxu0 0.0
    %84 = vmatpush1.msra.mxu0 %v64
    %85 = vmatprep.subr.mxu0 0.0
    %86 = vmatpush1.msra.mxu0 %v65
    %87 = vmatprep.subr.mxu0 0.0
    %88 = vmatpush1.msra.mxu0 %v66
    %89 = vmatprep.subr.mxu0 0.0
    %90 = vmatpush1.msra.mxu0 %v67
    %91 = vmatprep.subr.mxu0 0.0
    %92 = vmatpush1.msra.mxu0 %v68
    %93 = vmatprep.subr.mxu0 0.0
    %94 = vmatpush1.msra.mxu0 %v69
    %95 = vmatprep.subr.mxu0 0.0
    %96 = vmatpush1.msra.mxu0 %v70
    %97 = vmatprep.subr.mxu0 0.0
    %98 = vmatpush1.msra.mxu0 %v71
    %99 = vmatprep.subr.mxu0 0.0
    %100 = vmatpush1.msra.mxu0 0.0
    %101 = vmatprep.subr.mxu0 0.0
    %102 = vmatpush1.msra.mxu0 0.0
    %103 = vmatprep.subr.mxu0 0.0
    %104 = vmatpush1.msra.mxu0 0.0
    %105 = vmatprep.subr.mxu0 0.0
    %106 = vmatpush1.msra.mxu0 0.0
    %107 = vmatprep.subr.mxu0 0.0
    %108 = vmatpush1.msra.mxu0 0.0
    %109 = vmatprep.subr.mxu0 0.0
    %110 = vmatpush1.msra.mxu0 0.0
    %111 = vmatprep.subr.mxu0 0.0
    %112 = vmatpush1.msra.mxu0 0.0
    %113 = vmatprep.subr.mxu0 0.0
    %114 = vmatpush1.msra.mxu0 0.0
    %115 = vmatprep.subr.mxu0 0.0
    %116 = vmatpush1.msra.mxu0 0.0
    %117 = vmatprep.subr.mxu0 0.0
    %118 = vmatpush1.msra.mxu0 0.0
    %119 = vmatprep.subr.mxu0 0.0
    %120 = vmatpush1.msra.mxu0 0.0
    %121 = vmatprep.subr.mxu0 0.0
    %122 = vmatpush1.msra.mxu0 0.0
    %123 = vmatprep.subr.mxu0 0.0
    %124 = vmatpush1.msra.mxu0 0.0
    %125 = vmatprep.subr.mxu0 0.0
    %126 = vmatpush1.msra.mxu0 0.0
    %127 = vmatprep.subr.mxu0 0.0
    %128 = vmatpush1.msra.mxu0 0.0
    %129 = vmatprep.subr.mxu0 0.0
    %130 = vmatpush1.msra.mxu0 0.0
    %131 = vmatprep.subr.mxu0 0.0
    %132 = vmatpush1.msra.mxu0 0.0
    %133 = vmatprep.subr.mxu0 0.0
    %134 = vmatpush1.msra.mxu0 0.0
    %135 = vmatprep.subr.mxu0 0.0
    %136 = vmatpush1.msra.mxu0 0.0
    %137 = vmatprep.subr.mxu0 0.0
    %138 = vmatpush1.msra.mxu0 0.0
    %139 = vmatprep.subr.mxu0 0.0
    %140 = vmatpush1.msra.mxu0 0.0
    %141 = vmatprep.subr.mxu0 0.0
    %142 = vmatpush1.msra.mxu0 0.0
    %143 = vmatprep.subr.mxu0 0.0
    %144 = vmatpush1.msra.mxu0 0.0
    %145 = vmatprep.subr.mxu0 0.0
    %146 = vmatpush1.msra.mxu0 0.0
    %147 = vmatprep.mubr.f32.mxu0 0.0
    %148 = vmatmul.mubr.f32.gmra.mrb[0].mxu0 %v81
    %v149 = vpop.f32.mrb[0].mxu0
    %v150 = vadd.f32 %v77, %v149
    %v151 = vpop.f32.mrb[0].mxu0
    %152 = vdwg.mxu0
    %v153 = vtanh.pop %v150
    %v154 = vld [vmem:[%s5] sm:$0x1]
    %v156 = vlaneseq
    %v157 = vshrl.u32 %v156, 7
    %v158 = vsub.s32 0, %v157
    %v159 = vrot.slane %v154, %v158
    %v161 = vmul.f32 %v153, %v159
    %v162 = vsel %vm79, %v161, 0.0
    %163 = vadd.xlane.f32.xlu0 %v162
    %v164 = vpop.xlane.xlu0 %163
    %s165 = sld [smem:[#allocation2]]
    %v166 = vstv %s165
    %v167 = vadd.f32 %v164, %v166
    %vm168 = vcmask 7168
    %169 = vst.msk [vmem:[%s7] sm:$0xff] %vm168, %v167
    // Predicated region
    $region34: #{tpu_custom_call.1} parent=1 // pred_check
      _
    $region35: #{tpu_custom_call.1} parent=1 // pred_check_branch
      %171 = sbr.rel (0) target = $region37
    $region36: #{tpu_custom_call.1} parent=1 // pred_region
      _
    $region37: #{tpu_custom_call.1} parent=1 // pred_fallthru
      _
    // Predicated region
    $region38: #{tpu_custom_call.1} parent=1 // pred_check
      _
    $region39: #{tpu_custom_call.1} parent=1 // pred_check_branch
      %173 = sbr.rel (0) target = $region41
    $region40: #{tpu_custom_call.1} parent=1 // pred_region
      _
    $region41: #{tpu_custom_call.1} parent=1 // pred_fallthru
      _
    %174 = vsyncpa [#allocation4], 1

</llo_original>
